<compile_context>
chip_gen: v7x
topology: tpu7x:2x2x1
jax: 0.10.0
libtpu: 0.0.40
codegen_flags: <defaults>
</compile_context>

<pallas_src>
import functools

import jax
import jax.numpy as jnp
from jax.experimental import pallas as pl
from jax.experimental.pallas import tpu as pltpu


def _round_up(x, m):
    return ((x + m - 1) // m) * m


def _pad2(x, rows, cols, dtype):
    x = x.astype(dtype)
    return jnp.pad(x, ((0, rows - x.shape[0]), (0, cols - x.shape[1])))


# ----------------------------------------------------------------------------------------
# Text encoder: tiny single-shot kernel. Computes scale * L2norm(texts @ W_txt + b_txt),
# written into a lane-dense (T_pad, D_pad) f32 block consumed by the main kernel.
# ----------------------------------------------------------------------------------------
def text_encode_kernel(scale_ref,   # SMEM (1,)  f32  exp(logit_scale)
                       txt_ref,     # VMEM (T_pad, F_txt_pad) bf16
                       wtxt_ref,    # VMEM (F_txt_pad, D_pad) bf16
                       btxt_ref,    # VMEM (1, D_pad) f32
                       tf_ref):     # VMEM (T_pad, D_pad) f32
    feat = jnp.dot(txt_ref[...], wtxt_ref[...], preferred_element_type=jnp.float32)
    feat = feat + btxt_ref[...]
    feat = feat * jax.lax.rsqrt(jnp.sum(feat * feat, axis=-1, keepdims=True) + 1e-12)
    tf_ref[...] = scale_ref[0] * feat   # fold logit scale into the small operand


def encode_texts(texts, w_txt, b_txt, scale, *, t_pad, d_pad):
    T, F_txt = texts.shape
    f_pad = _round_up(F_txt, 128)
    txt_p = _pad2(texts, t_pad, f_pad, jnp.bfloat16)
    wtxt_p = _pad2(w_txt, f_pad, d_pad, jnp.bfloat16)
    btxt_p = _pad2(b_txt.reshape(1, -1), 1, d_pad, jnp.float32)

    vmem = pl.BlockSpec(memory_space=pltpu.MemorySpace.VMEM)
    smem = pl.BlockSpec(memory_space=pltpu.MemorySpace.SMEM)
    return pl.pallas_call(
        text_encode_kernel,
        out_shape=jax.ShapeDtypeStruct((t_pad, d_pad), jnp.float32),
        in_specs=[smem, vmem, vmem, vmem],
        out_specs=vmem,
    )(scale, txt_p, wtxt_p, btxt_p)


# ----------------------------------------------------------------------------------------
# Main kernel: tiled image projection (B x K grid, f32 accumulator) + L2 norm +
# similarity + row softmax epilogue on the last K step.
# ----------------------------------------------------------------------------------------
def clip_image_sim_kernel(n_classes,        # static python int (valid class count)
                          img_ref,          # VMEM (TB, TK)        bf16
                          wimg_ref,         # VMEM (TK, D_pad)     bf16
                          bimg_ref,         # VMEM (1, D_pad)      f32
                          tf_ref,           # VMEM (T_pad, D_pad)  f32 (already scaled)
                          out_ref,          # VMEM (TB, T_pad)     f32 softmax probs
                          acc_ref):         # VMEM scratch (TB, D_pad) f32
    k = pl.program_id(1)

    @pl.when(k == 0)
    def _():
        acc_ref[...] = jnp.zeros_like(acc_ref)

    # bf16 x bf16 -> f32 accumulate on the MXU.
    acc_ref[...] += jnp.dot(img_ref[...], wimg_ref[...],
                            preferred_element_type=jnp.float32)

    @pl.when(k == pl.num_programs(1) - 1)
    def _():
        imf = acc_ref[...] + bimg_ref[...]
        imf = imf * jax.lax.rsqrt(jnp.sum(imf * imf, axis=-1, keepdims=True) + 1e-12)

        # Similarity: contract last dims directly (no materialized transpose of tf).
        logits = jax.lax.dot_general(
            imf, tf_ref[...],
            dimension_numbers=(((1,), (1,)), ((), ())),
            preferred_element_type=jnp.float32,
            precision=jax.lax.Precision.HIGHEST)

        # Mask padded class columns so the lane-dense padding doesn't dilute the softmax.
        col = jax.lax.broadcasted_iota(jnp.int32, logits.shape, 1)
        logits = jnp.where(col < n_classes, logits, jnp.float32(-1e30))

        m = jnp.max(logits, axis=-1, keepdims=True)
        e = jnp.exp(logits - m)
        denom = jnp.sum(e, axis=-1, keepdims=True)
        out_ref[...] = e * pl.reciprocal(denom, approx=True)


def clip_zeroshot_probs(images_nchw, texts, w_img, b_img, w_txt, b_txt, logit_scale_param):
    """Forward pass: softmax(exp(logit_scale) * norm(img_enc) @ norm(txt_enc).T, dim=-1)."""
    B = images_nchw.shape[0]
    T = texts.shape[0]
    D = w_img.shape[1]

    # TODO(synk): flatten + bf16 cast is one extra XLA pass over HBM; fusing it into the
    # image BlockSpec index_map would need an element-indexed gather over NCHW.
    images_flat = images_nchw.reshape(B, -1)
    F_img = images_flat.shape[1]

    d_pad = _round_up(D, 128)
    t_pad = _round_up(T, 128)

    # B/K tile plan (all tiles (8,128)-aligned; per-step footprint << 48 MiB even on v7x).
    b_pad = _round_up(B, 8)
    if b_pad >= 128:
        tb = 128
        b_pad = _round_up(b_pad, tb)
    else:
        tb = b_pad
    f_pad = _round_up(F_img, 128)
    tk = min(512, f_pad)
    f_pad = _round_up(f_pad, tk)
    nb, nk = b_pad // tb, f_pad // tk

    scale = jnp.exp(logit_scale_param).reshape(1).astype(jnp.float32)

    # Hoisted, scale-folded text features (constant across the image batch).
    tf = encode_texts(texts, w_txt, b_txt, scale, t_pad=t_pad, d_pad=d_pad)

    img_p = _pad2(images_flat, b_pad, f_pad, jnp.bfloat16)
    wimg_p = _pad2(w_img, f_pad, d_pad, jnp.bfloat16)
    bimg_p = _pad2(b_img.reshape(1, -1), 1, d_pad, jnp.float32)

    out_padded = pl.pallas_call(
        functools.partial(clip_image_sim_kernel, T),
        out_shape=jax.ShapeDtypeStruct((b_pad, t_pad), jnp.float32),
        grid_spec=pltpu.PrefetchScalarGridSpec(
            num_scalar_prefetch=0,
            grid=(nb, nk),
            in_specs=[
                pl.BlockSpec((tb, tk), lambda i, k: (i, k)),        # image tile
                pl.BlockSpec((tk, d_pad), lambda i, k: (k, 0)),     # image-proj weight tile
                pl.BlockSpec((1, d_pad), lambda i, k: (0, 0)),      # image-proj bias (resident)
                pl.BlockSpec((t_pad, d_pad), lambda i, k: (0, 0)),  # text features (resident)
            ],
            out_specs=pl.BlockSpec((tb, t_pad), lambda i, k: (i, 0)),
            scratch_shapes=[pltpu.VMEM((tb, d_pad), jnp.float32)],
        ),
        compiler_params=pltpu.CompilerParams(
            dimension_semantics=("parallel", "arbitrary"),
            vmem_limit_bytes=48 * 1024 * 1024,
        ),
    )(img_p, wimg_p, bimg_p, tf)

    return out_padded[:B, :T]


def reference_jax(images_nchw, texts, w_img, b_img, w_txt, b_txt, logit_scale_param):
    """Pure-JAX reference mirroring the kernel's mixed precision (bf16 matmul inputs)."""
    q = lambda x: x.astype(jnp.bfloat16).astype(jnp.float32)
    hi = jax.lax.Precision.HIGHEST
    B = images_nchw.shape[0]
    img = q(images_nchw.reshape(B, -1))
    imf = jnp.dot(img, q(w_img), precision=hi) + b_img
    imf = imf / jnp.sqrt(jnp.sum(imf * imf, axis=-1, keepdims=True) + 1e-12)
    tf = jnp.dot(q(texts), q(w_txt), precision=hi) + b_txt
    tf = tf / jnp.sqrt(jnp.sum(tf * tf, axis=-1, keepdims=True) + 1e-12)
    logits = jnp.exp(logit_scale_param) * jnp.dot(imf, tf.T, precision=hi)
    return jax.nn.softmax(logits, axis=-1)


if __name__ == "__main__":
    # Small shapes consistent with the forward pass.
    B, C, H, W = 2, 4, 16, 16      # images: NCHW
    T, F_TXT = 8, 32               # 8 class-prompt texts, 32-dim text input features
    D = 32                         # shared embedding dim
    F_IMG = C * H * W              # 1024

    key = jax.random.PRNGKey(0)
    k1, k2, k3, k4, k5, k6 = jax.random.split(key, 6)

    images = jax.random.normal(k1, (B, C, H, W), dtype=jnp.float32)
    texts = jax.random.normal(k2, (T, F_TXT), dtype=jnp.float32)

    # Deterministic synthetic parameters (no checkpoint loading).
    w_img = 0.02 * jax.random.normal(k3, (F_IMG, D), dtype=jnp.float32)
    b_img = 0.01 * jax.random.normal(k4, (D,), dtype=jnp.float32)
    w_txt = 0.02 * jax.random.normal(k5, (F_TXT, D), dtype=jnp.float32)
    b_txt = 0.01 * jax.random.normal(k6, (D,), dtype=jnp.float32)
    logit_scale_param = jnp.float32(jnp.log(1.0 / 0.07))   # CLIP default init

    probs = clip_zeroshot_probs(images, texts, w_img, b_img, w_txt, b_txt, logit_scale_param)
    probs = jax.block_until_ready(probs)

    ref = reference_jax(images, texts, w_img, b_img, w_txt, b_txt, logit_scale_param)
    assert probs.shape == (B, T)
    assert jnp.allclose(probs, ref, atol=5e-3, rtol=5e-3), jnp.max(jnp.abs(probs - ref))
    assert jnp.allclose(jnp.sum(probs, axis=-1), 1.0, atol=2e-3)

    print("KERNEL_OK")
</pallas_src>

<mosaic_0001>
module attributes {stable_mosaic.version = 11 : i64} {
  func.func @text_encode_kernel(%arg0: memref<1xf32, #tpu.memory_space<smem>>, %arg1: memref<128x128xbf16, #tpu.memory_space<vmem>>, %arg2: memref<128x128xbf16, #tpu.memory_space<vmem>>, %arg3: memref<1x128xf32, #tpu.memory_space<vmem>>, %arg4: memref<128x128xf32, #tpu.memory_space<vmem>>) attributes {dimension_semantics = [], scalar_prefetch = 0 : i64, scratch_operands = 0 : i64, tpu.core_type = #tpu.core_type<tc>} {
    %c0 = arith.constant 0 : index
    %c0_0 = arith.constant 0 : index
    %0 = vector.load %arg1[%c0, %c0_0] : memref<128x128xbf16, #tpu.memory_space<vmem>>, vector<128x128xbf16>
    %c0_1 = arith.constant 0 : index
    %c0_2 = arith.constant 0 : index
    %1 = vector.load %arg2[%c0_1, %c0_2] : memref<128x128xbf16, #tpu.memory_space<vmem>>, vector<128x128xbf16>
    %cst = arith.constant dense<0.000000e+00> : vector<128x128xf32>
    %2 = tpu.matmul %0, %1, %cst {dimension_numbers = #tpu.dot_dimension_numbers<[1], [0], [0], [1], [0, 0, 1, 1], [], []>} : vector<128x128xbf16>, vector<128x128xbf16>, vector<128x128xf32> -> vector<128x128xf32>
    %c0_3 = arith.constant 0 : index
    %c0_4 = arith.constant 0 : index
    %3 = vector.load %arg3[%c0_3, %c0_4] : memref<1x128xf32, #tpu.memory_space<vmem>>, vector<1x128xf32>
    %4 = vector.broadcast %3 : vector<1x128xf32> to vector<128x128xf32>
    %5 = arith.addf %2, %4 : vector<128x128xf32>
    %6 = arith.mulf %5, %5 : vector<128x128xf32>
    %cst_5 = arith.constant dense<0.000000e+00> : vector<128xf32>
    %7 = vector.multi_reduction <add>, %6, %cst_5 [1] : vector<128x128xf32> to vector<128xf32>
    %8 = vector.shape_cast %7 : vector<128xf32> to vector<128x1xf32>
    %cst_6 = arith.constant 9.99999996E-13 : f32
    %9 = vector.broadcast %cst_6 : f32 to vector<128x1xf32>
    %10 = arith.addf %8, %9 : vector<128x1xf32>
    %11 = math.rsqrt %10 : vector<128x1xf32>
    %12 = vector.broadcast %11 : vector<128x1xf32> to vector<128x128xf32>
    %13 = arith.mulf %5, %12 : vector<128x128xf32>
    %c0_7 = arith.constant 0 : index
    %14 = memref.load %arg0[%c0_7] : memref<1xf32, #tpu.memory_space<smem>>
    %15 = vector.broadcast %14 : f32 to vector<128x128xf32>
    %16 = arith.mulf %15, %13 : vector<128x128xf32>
    %c0_8 = arith.constant 0 : index
    %c0_9 = arith.constant 0 : index
    %17 = vector.load %arg4[%c0_8, %c0_9] : memref<128x128xf32, #tpu.memory_space<vmem>>, vector<128x128xf32>
    tpu.vector_store %arg4[%c0_8, %c0_9], %16 {strides = array<i32>} : memref<128x128xf32, #tpu.memory_space<vmem>>, vector<128x128xf32>,
    return
  }
}

</mosaic_0001>

<llo_original>
// kernel: tpu_custom_call.1
$region0: #{tpu_custom_call.1}
  #allocation0 [shape = 'u32[]', space=smem, size = 0x4, offset = 0x4, fixed_abs, tag = 'smem constant byte address 0x4 - core index']
  #allocation1 [shape = 'u32[144,128]{1,0:T(1,128)}', space=vmem, size = 0x12000, scoped, tag = 'internal scratch']
  #allocation2 [shape = 'f32[1]{0:T(128)S(6)}', space=smem, size = 0x200, scoped, tag = 'scoped memory for tpu_custom_call.1']
  %s0 = inlined_call_operand.<no memory space> [shape: f32[1], index: 0, kind: input, shape index: {}]
  %s1 = inlined_call_operand.hbm [shape: bf16[128,128], index: 1, kind: input, shape index: {}]
  %s2 = inlined_call_operand.hbm [shape: bf16[128,128], index: 2, kind: input, shape index: {}]
  %s3 = inlined_call_operand.vmem [shape: f32[1,128], index: 3, kind: input, shape index: {}]
  %s4 = inlined_call_operand.hbm [shape: f32[128,128], index: 4, kind: output, shape index: {}]
  %s5 = sld [smem:[#allocation0]]
  $region34: #{tpu_custom_call.1} parent=0
    _
  %s7 = ssub.s32 1, %s5
  %s8 = scalar_select 0, %s7, %s5
  %9 = sst [smem:[#allocation2]] %s0
  $region1: #{tpu_custom_call.1} parent=0
    #allocation3 [shape = 'u8[32768]{0}', space=vmem, size = 0x8000, scoped, tag = 'input window, operand 1, single buffered']
    #allocation4 [shape = 's32[1]{0}', space=sflag, size = 0x4, scoped, tag = 'scoped memory for tpu_custom_call.1']
    #allocation5 [shape = 's32[1]{0}', space=sflag, size = 0x4, scoped, tag = 'scoped memory for tpu_custom_call.1']
    #allocation6 [shape = 'u8[32768]{0}', space=vmem, size = 0x8000, scoped, tag = 'input window, operand 2, single buffered']
    #allocation7 [shape = 's32[1]{0}', space=sflag, size = 0x4, scoped, tag = 'scoped memory for tpu_custom_call.1']
    #allocation8 [shape = 'u8[65536]{0}', space=vmem, size = 0x10000, scoped, tag = 'output window, operand 0, single buffered']
    %10 = vsyncpa [#allocation4], 0
    %11 = vsyncpa [#allocation7], 0
    %12 = vsyncpa [#allocation5], 0
    // Predicated region
    $region2: #{tpu_custom_call.1} parent=1 // pred_check
      _
    $region3: #{tpu_custom_call.1} parent=1 // pred_check_branch
      %14 = sbr.rel (0) target = $region5
    $region4: #{tpu_custom_call.1} parent=1 // pred_region
      _
    $region5: #{tpu_custom_call.1} parent=1 // pred_fallthru
      _
    // Predicated region
    $region6: #{tpu_custom_call.1} parent=1 // pred_check
      _
    $region7: #{tpu_custom_call.1} parent=1 // pred_check_branch
      %16 = sbr.rel (0) target = $region9
    $region8: #{tpu_custom_call.1} parent=1 // pred_region
      %s18 = ssub.s32 1024, 1024
      %19 = vsyncadd [#allocation4], %s18
      %s20 = sshll.u32 [#allocation3], 4
      %s21 = int_to_ptr.vmem [resolvable:$true] %s20
      %26 = dma.hbm_to_vmem [thread:$0]  %s1, 1024, %s21, [#allocation4], 64, 64, 4
    $region9: #{tpu_custom_call.1} parent=1 // pred_fallthru
      _
    // Predicated region
    $region10: #{tpu_custom_call.1} parent=1 // pred_check
      _
    $region11: #{tpu_custom_call.1} parent=1 // pred_check_branch
      %28 = sbr.rel (0) target = $region13
    $region12: #{tpu_custom_call.1} parent=1 // pred_region
      %s30 = ssub.s32 1024, 1024
      %31 = vsyncadd [#allocation7], %s30
      %s32 = sshll.u32 [#allocation6], 4
      %s33 = int_to_ptr.vmem [resolvable:$true] %s32
      %38 = dma.hbm_to_vmem [thread:$0]  %s2, 1024, %s33, [#allocation7], 64, 64, 4
    $region13: #{tpu_custom_call.1} parent=1 // pred_fallthru
      _
    // Predicated region
    $region14: #{tpu_custom_call.1} parent=1 // pred_check
      _
    $region15: #{tpu_custom_call.1} parent=1 // pred_check_branch
      %40 = sbr.rel (0) target = $region17
    $region16: #{tpu_custom_call.1} parent=1 // pred_region
      _
    $region17: #{tpu_custom_call.1} parent=1 // pred_fallthru
      _
    // Predicated region
    $region18: #{tpu_custom_call.1} parent=1 // pred_check
      _
    $region19: #{tpu_custom_call.1} parent=1 // pred_check_branch
      %42 = sbr.rel (0) target = $region21
    $region20: #{tpu_custom_call.1} parent=1 // pred_region
      %43 = dma.done [#allocation4], 1024
    $region21: #{tpu_custom_call.1} parent=1 // pred_fallthru
      _
    // Predicated region
    $region22: #{tpu_custom_call.1} parent=1 // pred_check
      _
    $region23: #{tpu_custom_call.1} parent=1 // pred_check_branch
      %45 = sbr.rel (0) target = $region25
    $region24: #{tpu_custom_call.1} parent=1 // pred_region
      %46 = dma.done [#allocation7], 1024
    $region25: #{tpu_custom_call.1} parent=1 // pred_fallthru
      _
    %v48 = vld [vmem:[#allocation3] sm:$0xf]
    %v49 = vld [vmem:[#allocation3 + $0x4] sm:$0xf]
    %v50 = vld [vmem:[#allocation3 + $0x8] sm:$0xf]
    %v51 = vld [vmem:[#allocation3 + $0xc] sm:$0xf]
    %v52 = vld [vmem:[#allocation3 + $0x10] sm:$0xf]
    %v53 = vld [vmem:[#allocation3 + $0x14] sm:$0xf]
    %v54 = vld [vmem:[#allocation3 + $0x18] sm:$0xf]
    %v55 = vld [vmem:[#allocation3 + $0x1c] sm:$0xf]
    %v56 = vld [vmem:[#allocation3 + $0x20] sm:$0xf]
    %v57 = vld [vmem:[#allocation3 + $0x24] sm:$0xf]
    %v58 = vld [vmem:[#allocation3 + $0x28] sm:$0xf]
    %v59 = vld [vmem:[#allocation3 + $0x2c] sm:$0xf]
    %v60 = vld [vmem:[#allocation3 + $0x30] sm:$0xf]
    %v61 = vld [vmem:[#allocation3 + $0x34] sm:$0xf]
    %v62 = vld [vmem:[#allocation3 + $0x38] sm:$0xf]
    %v63 = vld [vmem:[#allocation3 + $0x3c] sm:$0xf]
    %v64 = vld [vmem:[#allocation6] sm:$0xf]
    %v65 = vld [vmem:[#allocation6 + $0x4] sm:$0xf]
    %v66 = vld [vmem:[#allocation6 + $0x8] sm:$0xf]
    %v67 = vld [vmem:[#allocation6 + $0xc] sm:$0xf]
    %v68 = vld [vmem:[#allocation6 + $0x10] sm:$0xf]
    %v69 = vld [vmem:[#allocation6 + $0x14] sm:$0xf]
    %v70 = vld [vmem:[#allocation6 + $0x18] sm:$0xf]
    %v71 = vld [vmem:[#allocation6 + $0x1c] sm:$0xf]
    %v72 = vld [vmem:[#allocation6 + $0x20] sm:$0xf]
    %v73 = vld [vmem:[#allocation6 + $0x24] sm:$0xf]
    %v74 = vld [vmem:[#allocation6 + $0x28] sm:$0xf]
    %v75 = vld [vmem:[#allocation6 + $0x2c] sm:$0xf]
    %v76 = vld [vmem:[#allocation6 + $0x30] sm:$0xf]
    %v77 = vld [vmem:[#allocation6 + $0x34] sm:$0xf]
    %v78 = vld [vmem:[#allocation6 + $0x38] sm:$0xf]
    %v79 = vld [vmem:[#allocation6 + $0x3c] sm:$0xf]
    %v80 = vld [vmem:[%s3] sm:$0x1]
    %v82 = vlaneseq
    %v83 = vshrl.u32 %v82, 7
    %v84 = vsub.s32 0, %v83
    %v85 = vrot.slane %v80, %v84
    %v103 = vunpack.c.l.b16 %v48
    %v104 = vunpack.c.l.b16 %v49
    %v105 = vunpack.c.l.b16 %v50
    %v106 = vunpack.c.l.b16 %v51
    %v107 = vunpack.c.l.b16 %v52
    %v108 = vunpack.c.l.b16 %v53
    %v109 = vunpack.c.l.b16 %v54
    %v110 = vunpack.c.l.b16 %v55
    %v111 = vunpack.c.l.b16 %v56
    %v112 = vunpack.c.l.b16 %v57
    %v113 = vunpack.c.l.b16 %v58
    %v114 = vunpack.c.l.b16 %v59
    %v115 = vunpack.c.l.b16 %v60
    %v116 = vunpack.c.l.b16 %v61
    %v117 = vunpack.c.l.b16 %v62
    %v118 = vunpack.c.l.b16 %v63
    %v119 = vpack.c.b16 %v104, %v103
    %v120 = vpack.c.b16 %v106, %v105
    %v121 = vpack.c.b16 %v108, %v107
    %v122 = vpack.c.b16 %v110, %v109
    %v123 = vpack.c.b16 %v112, %v111
    %v124 = vpack.c.b16 %v114, %v113
    %v125 = vpack.c.b16 %v116, %v115
    %v126 = vpack.c.b16 %v118, %v117
    %v151 = vunpack.c.l.b16 %v64
    %v152 = vunpack.c.l.b16 %v65
    %v153 = vunpack.c.l.b16 %v66
    %v154 = vunpack.c.l.b16 %v67
    %v155 = vunpack.c.l.b16 %v68
    %v156 = vunpack.c.l.b16 %v69
    %v157 = vunpack.c.l.b16 %v70
    %v158 = vunpack.c.l.b16 %v71
    %v159 = vunpack.c.l.b16 %v72
    %v160 = vunpack.c.l.b16 %v73
    %v161 = vunpack.c.l.b16 %v74
    %v162 = vunpack.c.l.b16 %v75
    %v163 = vunpack.c.l.b16 %v76
    %v164 = vunpack.c.l.b16 %v77
    %v165 = vunpack.c.l.b16 %v78
    %v166 = vunpack.c.l.b16 %v79
    %v167 = vpack.c.b16 %v152, %v151
    %v168 = vpack.c.b16 %v154, %v153
    %v169 = vpack.c.b16 %v156, %v155
    %v170 = vpack.c.b16 %v158, %v157
    %v171 = vpack.c.b16 %v160, %v159
    %v172 = vpack.c.b16 %v162, %v161
    %v173 = vpack.c.b16 %v164, %v163
    %v174 = vpack.c.b16 %v166, %v165
    %183 = vmatprep.subr.bf16.mxu0 0
    %184 = vmatpush1.bf16.msra.mxu0 %v167
    %185 = vmatprep.subr.bf16.mxu0 0
    %186 = vmatpush1.bf16.msra.mxu0 %v168
    %187 = vmatprep.subr.bf16.mxu0 0
    %188 = vmatpush1.bf16.msra.mxu0 %v169
    %189 = vmatprep.subr.bf16.mxu0 0
    %190 = vmatpush1.bf16.msra.mxu0 %v170
    %191 = vmatprep.subr.bf16.mxu0 0
    %192 = vmatpush1.bf16.msra.mxu0 %v171
    %193 = vmatprep.subr.bf16.mxu0 0
    %194 = vmatpush1.bf16.msra.mxu0 %v172
    %195 = vmatprep.subr.bf16.mxu0 0
    %196 = vmatpush1.bf16.msra.mxu0 %v173
    %197 = vmatprep.subr.bf16.mxu0 0
    %198 = vmatpush1.bf16.msra.mxu0 %v174
    %199 = vmatprep.subr.bf16.mxu0 0
    %200 = vmatpush1.bf16.msra.mxu0 0
    %201 = vmatprep.subr.bf16.mxu0 0
    %202 = vmatpush1.bf16.msra.mxu0 0
    %203 = vmatprep.subr.bf16.mxu0 0
    %204 = vmatpush1.bf16.msra.mxu0 0
    %205 = vmatprep.subr.bf16.mxu0 0
    %206 = vmatpush1.bf16.msra.mxu0 0
    %207 = vmatprep.subr.bf16.mxu0 0
    %208 = vmatpush1.bf16.msra.mxu0 0
    %209 = vmatprep.subr.bf16.mxu0 0
    %210 = vmatpush1.bf16.msra.mxu0 0
    %211 = vmatprep.subr.bf16.mxu0 0
    %212 = vmatpush1.bf16.msra.mxu0 0
    %213 = vmatprep.subr.bf16.mxu0 0
    %214 = vmatpush1.bf16.msra.mxu0 0
    %215 = vmatprep.mubr.bf16.mxu0 0
    %216 = vmatmul.mubr.bf16.gmra.mrb[0].mxu0 %v119
    %v217 = vpop.f32.mrb[0].mxu0
    %v218 = vadd.f32 %v85, %v217
    %v219 = vpop.f32.mrb[0].mxu0
    %v220 = vpop.f32.mrb[0].mxu0
    %v221 = vadd.f32 %v85, %v220
    %v222 = vpop.f32.mrb[0].mxu0
    %223 = vmatprep.mubr.bf16.mxu0 0
    %224 = vmatmul.mubr.bf16.gmra.mrb[0].mxu0 %v120
    %v225 = vpop.f32.mrb[0].mxu0
    %v226 = vadd.f32 %v85, %v225
    %v227 = vpop.f32.mrb[0].mxu0
    %v228 = vpop.f32.mrb[0].mxu0
    %v229 = vadd.f32 %v85, %v228
    %v230 = vpop.f32.mrb[0].mxu0
    %231 = vmatprep.mubr.bf16.mxu0 0
    %232 = vmatmul.mubr.bf16.gmra.mrb[0].mxu0 %v121
    %v233 = vpop.f32.mrb[0].mxu0
    %v234 = vadd.f32 %v85, %v233
    %v235 = vpop.f32.mrb[0].mxu0
    %v236 = vpop.f32.mrb[0].mxu0
    %v237 = vadd.f32 %v85, %v236
    %v238 = vpop.f32.mrb[0].mxu0
    %239 = vmatprep.mubr.bf16.mxu0 0
    %240 = vmatmul.mubr.bf16.gmra.mrb[0].mxu0 %v122
    %v241 = vpop.f32.mrb[0].mxu0
    %v242 = vadd.f32 %v85, %v241
    %v243 = vpop.f32.mrb[0].mxu0
    %v244 = vpop.f32.mrb[0].mxu0
    %v245 = vadd.f32 %v85, %v244
    %v246 = vpop.f32.mrb[0].mxu0
    %247 = vmatprep.mubr.bf16.mxu0 0
    %248 = vmatmul.mubr.bf16.gmra.mrb[0].mxu0 %v123
    %v249 = vpop.f32.mrb[0].mxu0
    %v250 = vadd.f32 %v85, %v249
    %v251 = vpop.f32.mrb[0].mxu0
    %v252 = vpop.f32.mrb[0].mxu0
    %v253 = vadd.f32 %v85, %v252
    %v254 = vpop.f32.mrb[0].mxu0
    %255 = vmatprep.mubr.bf16.mxu0 0
    %256 = vmatmul.mubr.bf16.gmra.mrb[0].mxu0 %v124
    %v257 = vpop.f32.mrb[0].mxu0
    %v258 = vadd.f32 %v85, %v257
    %v259 = vpop.f32.mrb[0].mxu0
    %v260 = vpop.f32.mrb[0].mxu0
    %v261 = vadd.f32 %v85, %v260
    %v262 = vpop.f32.mrb[0].mxu0
    %263 = vmatprep.mubr.bf16.mxu0 0
    %264 = vmatmul.mubr.bf16.gmra.mrb[0].mxu0 %v125
    %v265 = vpop.f32.mrb[0].mxu0
    %v266 = vadd.f32 %v85, %v265
    %v267 = vpop.f32.mrb[0].mxu0
    %v268 = vpop.f32.mrb[0].mxu0
    %v269 = vadd.f32 %v85, %v268
    %v270 = vpop.f32.mrb[0].mxu0
    %271 = vmatprep.mubr.bf16.mxu0 0
    %272 = vmatmul.mubr.bf16.gmra.mrb[0].mxu0 %v126
    %v273 = vpop.f32.mrb[0].mxu0
    %v274 = vadd.f32 %v85, %v273
    %v275 = vpop.f32.mrb[0].mxu0
    %v276 = vpop.f32.mrb[0].mxu0
    %v277 = vadd.f32 %v85, %v276
    %v278 = vpop.f32.mrb[0].mxu0
    %279 = vdwg.mxu0
    %v280 = vmul.f32 %v218, %v218
    %v281 = vmul.f32 %v221, %v221
    %v282 = vmul.f32 %v226, %v226
    %v283 = vmul.f32 %v229, %v229
    %v284 = vmul.f32 %v234, %v234
    %v285 = vmul.f32 %v237, %v237
    %v286 = vmul.f32 %v242, %v242
    %v287 = vmul.f32 %v245, %v245
    %v288 = vmul.f32 %v250, %v250
    %v289 = vmul.f32 %v253, %v253
    %v290 = vmul.f32 %v258, %v258
    %v291 = vmul.f32 %v261, %v261
    %v292 = vmul.f32 %v266, %v266
    %v293 = vmul.f32 %v269, %v269
    %v294 = vmul.f32 %v274, %v274
    %v295 = vmul.f32 %v277, %v277
    %296 = vadd.xlane.f32.xlu0 %v280
    %v297 = vpop.xlane.xlu0 %296
    %298 = vadd.xlane.f32.xlu0 %v281
    %v299 = vpop.xlane.xlu0 %298
    %300 = vadd.xlane.f32.xlu0 %v282
    %v301 = vpop.xlane.xlu0 %300
    %302 = vadd.xlane.f32.xlu0 %v283
    %v303 = vpop.xlane.xlu0 %302
    %304 = vadd.xlane.f32.xlu0 %v284
    %v305 = vpop.xlane.xlu0 %304
    %306 = vadd.xlane.f32.xlu0 %v285
    %v307 = vpop.xlane.xlu0 %306
    %308 = vadd.xlane.f32.xlu0 %v286
    %v309 = vpop.xlane.xlu0 %308
    %310 = vadd.xlane.f32.xlu0 %v287
    %v311 = vpop.xlane.xlu0 %310
    %312 = vadd.xlane.f32.xlu0 %v288
    %v313 = vpop.xlane.xlu0 %312
    %314 = vadd.xlane.f32.xlu0 %v289
    %v315 = vpop.xlane.xlu0 %314
    %316 = vadd.xlane.f32.xlu0 %v290
    %v317 = vpop.xlane.xlu0 %316
    %318 = vadd.xlane.f32.xlu0 %v291
    %v319 = vpop.xlane.xlu0 %318
    %320 = vadd.xlane.f32.xlu0 %v292
    %v321 = vpop.xlane.xlu0 %320
    %322 = vadd.xlane.f32.xlu0 %v293
    %v323 = vpop.xlane.xlu0 %322
    %324 = vadd.xlane.f32.xlu0 %v294
    %v325 = vpop.xlane.xlu0 %324
    %326 = vadd.xlane.f32.xlu0 %v295
    %v327 = vpop.xlane.xlu0 %326
    %v328 = vadd.f32 %v297, 1e-12
    %v329 = vadd.f32 %v299, 1e-12
    %v330 = vadd.f32 %v301, 1e-12
    %v331 = vadd.f32 %v303, 1e-12
    %v332 = vadd.f32 %v305, 1e-12
    %v333 = vadd.f32 %v307, 1e-12
    %v334 = vadd.f32 %v309, 1e-12
    %v335 = vadd.f32 %v311, 1e-12
    %v336 = vadd.f32 %v313, 1e-12
    %v337 = vadd.f32 %v315, 1e-12
    %v338 = vadd.f32 %v317, 1e-12
    %v339 = vadd.f32 %v319, 1e-12
    %v340 = vadd.f32 %v321, 1e-12
    %v341 = vadd.f32 %v323, 1e-12
    %v342 = vadd.f32 %v325, 1e-12
    %v343 = vadd.f32 %v327, 1e-12
    %v344 = vrsqrt.pop %v328
    %v345 = vrsqrt.pop %v329
    %v346 = vrsqrt.pop %v330
    %v347 = vrsqrt.pop %v331
    %v348 = vrsqrt.pop %v332
    %v349 = vrsqrt.pop %v333
    %v350 = vrsqrt.pop %v334
    %v351 = vrsqrt.pop %v335
    %v352 = vrsqrt.pop %v336
    %v353 = vrsqrt.pop %v337
    %v354 = vrsqrt.pop %v338
    %v355 = vrsqrt.pop %v339
    %v356 = vrsqrt.pop %v340
    %v357 = vrsqrt.pop %v341
    %v358 = vrsqrt.pop %v342
    %v359 = vrsqrt.pop %v343
    %v360 = vmul.f32 %v218, %v344
    %v361 = vmul.f32 %v221, %v345
    %v362 = vmul.f32 %v226, %v346
    %v363 = vmul.f32 %v229, %v347
    %v364 = vmul.f32 %v234, %v348
    %v365 = vmul.f32 %v237, %v349
    %v366 = vmul.f32 %v242, %v350
    %v367 = vmul.f32 %v245, %v351
    %v368 = vmul.f32 %v250, %v352
    %v369 = vmul.f32 %v253, %v353
    %v370 = vmul.f32 %v258, %v354
    %v371 = vmul.f32 %v261, %v355
    %v372 = vmul.f32 %v266, %v356
    %v373 = vmul.f32 %v269, %v357
    %v374 = vmul.f32 %v274, %v358
    %v375 = vmul.f32 %v277, %v359
    %s376 = sld [smem:[#allocation2]]
    %v377 = vstv %s376
    %v378 = vmul.f32 %v377, %v360
    %v379 = vmul.f32 %v377, %v361
    %v380 = vmul.f32 %v377, %v362
    %v381 = vmul.f32 %v377, %v363
    %v382 = vmul.f32 %v377, %v364
    %v383 = vmul.f32 %v377, %v365
    %v384 = vmul.f32 %v377, %v366
    %v385 = vmul.f32 %v377, %v367
    %v386 = vmul.f32 %v377, %v368
    %v387 = vmul.f32 %v377, %v369
    %v388 = vmul.f32 %v377, %v370
    %v389 = vmul.f32 %v377, %v371
    %v390 = vmul.f32 %v377, %v372
    %v391 = vmul.f32 %v377, %v373
    %v392 = vmul.f32 %v377, %v374
    %v393 = vmul.f32 %v377, %v375
    %394 = vst [vmem:[#allocation8] sm:$0xff] %v378
    %395 = vst [vmem:[#allocation8 + $0x8] sm:$0xff] %v379
    %396 = vst [vmem:[#allocation8 + $0x10] sm:$0xff] %v380
    %397 = vst [vmem:[#allocation8 + $0x18] sm:$0xff] %v381
    %398 = vst [vmem:[#allocation8 + $0x20] sm:$0xff] %v382
    %399 = vst [vmem:[#allocation8 + $0x28] sm:$0xff] %v383
    %400 = vst [vmem:[#allocation8 + $0x30] sm:$0xff] %v384
    %401 = vst [vmem:[#allocation8 + $0x38] sm:$0xff] %v385
    %402 = vst [vmem:[#allocation8 + $0x40] sm:$0xff] %v386
    %403 = vst [vmem:[#allocation8 + $0x48] sm:$0xff] %v387
    %404 = vst [vmem:[#allocation8 + $0x50] sm:$0xff] %v388
    %405 = vst [vmem:[#allocation8 + $0x58] sm:$0xff] %v389
    %406 = vst [vmem:[#allocation8 + $0x60] sm:$0xff] %v390
    %407 = vst [vmem:[#allocation8 + $0x68] sm:$0xff] %v391
    %408 = vst [vmem:[#allocation8 + $0x70] sm:$0xff] %v392
    %409 = vst [vmem:[#allocation8 + $0x78] sm:$0xff] %v393
    // Predicated region
    $region26: #{tpu_custom_call.1} parent=1 // pred_check
      _
    $region27: #{tpu_custom_call.1} parent=1 // pred_check_branch
      %411 = sbr.rel (0) target = $region29
    $region28: #{tpu_custom_call.1} parent=1 // pred_region
      %s413 = ssub.s32 2048, 2048
      %414 = vsyncadd [#allocation5], %s413
      %s415 = sshll.u32 [#allocation8], 4
      %s416 = int_to_ptr.vmem [resolvable:$true] %s415
      %421 = dma.vmem_to_hbm [thread:$0]  %s416, 2048, %s4, [#allocation5], 128, 128, 8
    $region29: #{tpu_custom_call.1} parent=1 // pred_fallthru
      _
    // Predicated region
    $region30: #{tpu_custom_call.1} parent=1 // pred_check
      _
    $region31: #{tpu_custom_call.1} parent=1 // pred_check_branch
      %423 = sbr.rel (0) target = $region33
    $region32: #{tpu_custom_call.1} parent=1 // pred_region
      %424 = dma.done [#allocation5], 2048
    $region33: #{tpu_custom_call.1} parent=1 // pred_fallthru
      _
    %425 = vsyncpa [#allocation4], 1
    %426 = vsyncpa [#allocation7], 1
    %427 = vsyncpa [#allocation5], 1

</llo_original>
